<compile_context>
chip_gen: v5e
topology: v5e:2x2
jax: 0.10.0
libtpu: 0.0.40
codegen_flags: <defaults>
</compile_context>

<pallas_src>
import jax
import jax.numpy as jnp
from jax import lax
from jax.experimental import pallas as pl
from jax.experimental.pallas import tpu as pltpu


def _round_up(n, m):
    return ((n + m - 1) // m) * m


def _cdiv(a, b):
    return -(-a // b)


_CHUNK = 512  # lanes per in-kernel chunk (4 x 128); bounds h1/h2 to ~32/16 vregs


def _choose_tile(batch, batch_tile):
    """Pick the batch-tile (lane) size.

    - multiple of 128 (lane width); multiple of _CHUNK once above it
    - as large as `batch_tile` to amortize the ~0.35us per-grid-step overhead
    - even number of tiles (>=2) once batch is large enough, so the "parallel"
      grid axis shards across v7x's two TensorCores
    VMEM is not the constraint here (tile footprint ~1 MiB at tb=8192).
    """
    b_ceil = _round_up(batch, 128)
    if b_ceil <= _CHUNK:
        return b_ceil
    num_tiles = max(2, _cdiv(b_ceil, batch_tile))
    num_tiles = _round_up(num_tiles, 2)          # even tile count (megacore split)
    return _round_up(_cdiv(b_ceil, num_tiles), _CHUNK)


def _make_kernel(num_chunks, chunk):
    def kernel(x_ref, w1_ref, b1_ref, w2_ref, b2_ref, w3_ref, b3_ref, o_ref):
        # x_ref : (tb, D)  f32   -- natural layout; cast to bf16 in-kernel
        # w1_ref: (64, D)  bf16   b1_ref: (64, 1) f32
        # w2_ref: (32, 64) bf16   b2_ref: (32, 1) f32
        # w3_ref: (32, 1)  f32    b3_ref: (1, 1)  f32
        # o_ref : (1, tb)  f32   -- lane-dense output (batch on the lane axis)
        w1 = w1_ref[...]
        b1 = b1_ref[...]
        w2 = w2_ref[...]
        b2 = b2_ref[...]
        w3 = w3_ref[...]
        b3 = b3_ref[...]

        # Static unrolled loop over lane chunks: per-chunk intermediates stay in
        # registers instead of becoming (64, tb)/(32, tb) VMEM temps.
        for c in range(num_chunks):
            start = c * chunk                                   # static offset
            xc = x_ref[pl.ds(start, chunk), :].astype(jnp.bfloat16)   # (chunk, D)

            # fc1: contract the D axis of both operands -> (64, chunk) f32 acc.
            h1 = lax.dot_general(
                w1, xc,
                dimension_numbers=(((1,), (1,)), ((), ())),
                preferred_element_type=jnp.float32)
            h1 = jnp.maximum(h1 + b1, 0.0)                      # f32 VPU (v5e-safe)

            # fc2: (32, 64) @ (64, chunk) -> (32, chunk) f32 acc.
            h2 = jnp.dot(w2, h1.astype(jnp.bfloat16),
                         preferred_element_type=jnp.float32)
            h2 = jnp.maximum(h2 + b2, 0.0)

            # fc3 (K=32 -> 1 output): VPU multiply + sublane (XLU) reduce, not an
            # almost-empty MXU pass.
            out = jnp.sum(h2 * w3, axis=0, keepdims=True) + b3  # (1, chunk)
            o_ref[:, pl.ds(start, chunk)] = out.astype(o_ref.dtype)

    return kernel


def stress_predictor_forward(x, params, *, batch_tile=8192):
    """x: (B, input_dim) f32.  Returns (B, 1) f32 (same semantics as the nn.Module)."""
    B, D = x.shape
    w1, b1 = params["w1"], params["b1"]   # (64, D),  (64, 1)
    w2, b2 = params["w2"], params["b2"]   # (32, 64), (32, 1)
    w3, b3 = params["w3"], params["b3"]   # (32, 1),  (1, 1)

    tb = _choose_tile(B, batch_tile)
    num_tiles = _cdiv(B, tb)
    B_pad = num_tiles * tb
    chunk = min(_CHUNK, tb)
    num_chunks = tb // chunk

    # Pad only along batch (cheap); no transpose / cast pass in HBM.  Padded rows
    # yield relu(b1)-derived garbage in padded output columns, sliced off below.
    xp = x if B_pad == B else jnp.pad(x, ((0, B_pad - B), (0, 0)))

    w1b = w1.astype(jnp.bfloat16)
    w2b = w2.astype(jnp.bfloat16)

    flops = 2 * B_pad * (D * 64 + 64 * 32 + 32)
    bytes_accessed = (xp.size * 4 + B_pad * 4
                      + w1b.size * 2 + w2b.size * 2
                      + (w3.size + b1.size + b2.size + b3.size) * 4)

    full = lambda arr: pl.BlockSpec(arr.shape, lambda i: (0, 0))

    outT = pl.pallas_call(
        _make_kernel(num_chunks, chunk),
        out_shape=jax.ShapeDtypeStruct((1, B_pad), jnp.float32),
        grid_spec=pltpu.PrefetchScalarGridSpec(
            num_scalar_prefetch=0,
            grid=(num_tiles,),
            in_specs=[
                pl.BlockSpec((tb, D), lambda i: (i, 0)),   # batch tile, natural layout
                full(w1b), full(b1),
                full(w2b), full(b2),
                full(w3), full(b3),
            ],
            out_specs=pl.BlockSpec((1, tb), lambda i: (0, i)),
        ),
        compiler_params=pltpu.CompilerParams(
            dimension_semantics=("parallel",),
            vmem_limit_bytes=32 * 1024 * 1024,   # safe on v5e/v6e (128 MiB) and v7x (64 MiB)
        ),
        cost_estimate=pl.CostEstimate(
            flops=flops, transcendentals=0, bytes_accessed=bytes_accessed),
    )(xp, w1b, b1, w2b, b2, w3, b3)

    # Drop padded columns, present PyTorch-shaped (B, 1) output.
    return outT[0, :B].reshape(B, 1)


def init_params(key, input_dim):
    """Deterministic synthetic init, PyTorch Linear-style fan-in bounds.
    Weights kept in (out_features, in_features) layout (matches nn.Linear.weight),
    biases as column vectors; fc3 weight stored transposed as (32, 1)."""
    k1, k2, k3, k4, k5, k6 = jax.random.split(key, 6)

    def uniform(k, shape, fan_in):
        bound = 1.0 / jnp.sqrt(jnp.float32(fan_in))
        return jax.random.uniform(k, shape, jnp.float32, -bound, bound)

    return {
        "w1": uniform(k1, (64, input_dim), input_dim),
        "b1": uniform(k2, (64, 1), input_dim),
        "w2": uniform(k3, (32, 64), 64),
        "b2": uniform(k4, (32, 1), 64),
        "w3": uniform(k5, (32, 1), 32),
        "b3": uniform(k6, (1, 1), 32),
    }


def reference_forward(x, params):
    """Pure-JAX f32 reference with nn.Module semantics."""
    h1 = jnp.maximum(x @ params["w1"].T + params["b1"].T, 0.0)
    h2 = jnp.maximum(h1 @ params["w2"].T + params["b2"].T, 0.0)
    return h2 @ params["w3"] + params["b3"]


if __name__ == "__main__":
    key = jax.random.PRNGKey(0)
    kx, kp = jax.random.split(key)

    batch, input_dim = 8, 16
    x = jax.random.normal(kx, (batch, input_dim), dtype=jnp.float32)
    params = init_params(kp, input_dim)

    out = stress_predictor_forward(x, params)
    out = jax.block_until_ready(out)

    ref = reference_forward(x, params)
    assert out.shape == (batch, 1)
    # bf16 matmul operands (f32 accumulation) -> loosened tolerance vs f32 reference.
    assert jnp.allclose(out, ref, atol=3e-2, rtol=3e-2), (
        f"max abs err {jnp.max(jnp.abs(out - ref))}")

    print("KERNEL_OK")
</pallas_src>

<mosaic_0001>
module attributes {stable_mosaic.version = 11 : i64} {
  func.func @kernel(%arg0: i32, %arg1: memref<128x16xf32, #tpu.memory_space<vmem>>, %arg2: memref<64x16xbf16, #tpu.memory_space<vmem>>, %arg3: memref<64x1xf32, #tpu.memory_space<vmem>>, %arg4: memref<32x64xbf16, #tpu.memory_space<vmem>>, %arg5: memref<32x1xf32, #tpu.memory_space<vmem>>, %arg6: memref<32x1xf32, #tpu.memory_space<vmem>>, %arg7: memref<1x1xf32, #tpu.memory_space<vmem>>, %arg8: memref<1x128xf32, #tpu.memory_space<vmem>>) attributes {dimension_semantics = [#tpu.dimension_semantics<parallel>], iteration_bounds = array<i64: 1>, scalar_prefetch = 0 : i64, scratch_operands = 0 : i64, tpu.core_type = #tpu.core_type<tc>, window_params = [{transform_indices = @transform_0, window_bounds = array<i64: 128, 16>}, {pipeline_mode = #tpu.pipeline_mode<synchronous>, transform_indices = @transform_1, window_bounds = array<i64: 64, 16>}, {pipeline_mode = #tpu.pipeline_mode<synchronous>, transform_indices = @transform_2, window_bounds = array<i64: 64, 1>}, {pipeline_mode = #tpu.pipeline_mode<synchronous>, transform_indices = @transform_3, window_bounds = array<i64: 32, 64>}, {pipeline_mode = #tpu.pipeline_mode<synchronous>, transform_indices = @transform_4, window_bounds = array<i64: 32, 1>}, {pipeline_mode = #tpu.pipeline_mode<synchronous>, transform_indices = @transform_5, window_bounds = array<i64: 32, 1>}, {pipeline_mode = #tpu.pipeline_mode<synchronous>, transform_indices = @transform_6, window_bounds = array<i64: 1, 1>}, {transform_indices = @transform_7, window_bounds = array<i64: 1, 128>}]} {
    %c0 = arith.constant 0 : index
    %c0_0 = arith.constant 0 : index
    %0 = vector.load %arg2[%c0, %c0_0] : memref<64x16xbf16, #tpu.memory_space<vmem>>, vector<64x16xbf16>
    %c0_1 = arith.constant 0 : index
    %c0_2 = arith.constant 0 : index
    %1 = vector.load %arg3[%c0_1, %c0_2] : memref<64x1xf32, #tpu.memory_space<vmem>>, vector<64x1xf32>
    %c0_3 = arith.constant 0 : index
    %c0_4 = arith.constant 0 : index
    %2 = vector.load %arg4[%c0_3, %c0_4] : memref<32x64xbf16, #tpu.memory_space<vmem>>, vector<32x64xbf16>
    %c0_5 = arith.constant 0 : index
    %c0_6 = arith.constant 0 : index
    %3 = vector.load %arg5[%c0_5, %c0_6] : memref<32x1xf32, #tpu.memory_space<vmem>>, vector<32x1xf32>
    %c0_7 = arith.constant 0 : index
    %c0_8 = arith.constant 0 : index
    %4 = vector.load %arg6[%c0_7, %c0_8] : memref<32x1xf32, #tpu.memory_space<vmem>>, vector<32x1xf32>
    %c0_9 = arith.constant 0 : index
    %c0_10 = arith.constant 0 : index
    %5 = vector.load %arg7[%c0_9, %c0_10] : memref<1x1xf32, #tpu.memory_space<vmem>>, vector<1x1xf32>
    %c0_11 = arith.constant 0 : index
    %c0_12 = arith.constant 0 : index
    %6 = vector.load %arg1[%c0_11, %c0_12] : memref<128x16xf32, #tpu.memory_space<vmem>>, vector<128x16xf32>
    %7 = arith.truncf %6 : vector<128x16xf32> to vector<128x16xbf16>
    %cst = arith.constant dense<0.000000e+00> : vector<64x128xf32>
    %8 = tpu.matmul %0, %7, %cst {dimension_numbers = #tpu.dot_dimension_numbers<[1], [1], [0], [0], [0, 0, 1, 0], [], []>} : vector<64x16xbf16>, vector<128x16xbf16>, vector<64x128xf32> -> vector<64x128xf32>
    %9 = vector.broadcast %1 : vector<64x1xf32> to vector<64x128xf32>
    %10 = arith.addf %8, %9 : vector<64x128xf32>
    %cst_13 = arith.constant 0.000000e+00 : f32
    %11 = vector.broadcast %cst_13 : f32 to vector<64x128xf32>
    %12 = arith.maximumf %10, %11 : vector<64x128xf32>
    %13 = arith.truncf %12 : vector<64x128xf32> to vector<64x128xbf16>
    %cst_14 = arith.constant dense<0.000000e+00> : vector<32x128xf32>
    %14 = tpu.matmul %2, %13, %cst_14 {dimension_numbers = #tpu.dot_dimension_numbers<[1], [0], [0], [1], [0, 0, 1, 1], [], []>} : vector<32x64xbf16>, vector<64x128xbf16>, vector<32x128xf32> -> vector<32x128xf32>
    %15 = vector.broadcast %3 : vector<32x1xf32> to vector<32x128xf32>
    %16 = arith.addf %14, %15 : vector<32x128xf32>
    %cst_15 = arith.constant 0.000000e+00 : f32
    %17 = vector.broadcast %cst_15 : f32 to vector<32x128xf32>
    %18 = arith.maximumf %16, %17 : vector<32x128xf32>
    %19 = vector.broadcast %4 : vector<32x1xf32> to vector<32x128xf32>
    %20 = arith.mulf %18, %19 : vector<32x128xf32>
    %cst_16 = arith.constant dense<0.000000e+00> : vector<128xf32>
    %21 = vector.multi_reduction <add>, %20, %cst_16 [0] : vector<32x128xf32> to vector<128xf32>
    %22 = vector.shape_cast %21 : vector<128xf32> to vector<1x128xf32>
    %23 = vector.broadcast %5 : vector<1x1xf32> to vector<1x128xf32>
    %24 = arith.addf %22, %23 : vector<1x128xf32>
    %c0_17 = arith.constant 0 : index
    %c0_18 = arith.constant 0 : index
    %25 = vector.load %arg8[%c0_17, %c0_18] : memref<1x128xf32, #tpu.memory_space<vmem>>, vector<1x128xf32>
    tpu.vector_store %arg8[%c0_17, %c0_18], %24 {strides = array<i32>} : memref<1x128xf32, #tpu.memory_space<vmem>>, vector<1x128xf32>,
    return
  }
  func.func @transform_0(%arg0: i32) -> (i32, i32) {
    %c0_i32 = arith.constant 0 : i32
    %c0_i32_0 = arith.constant 0 : i32
    return %arg0, %c0_i32 : i32, i32
  }
  func.func @transform_1(%arg0: i32) -> (i32, i32) {
    %c0_i32 = arith.constant 0 : i32
    %c0_i32_0 = arith.constant 0 : i32
    %c0_i32_1 = arith.constant 0 : i32
    return %c0_i32, %c0_i32_0 : i32, i32
  }
  func.func @transform_2(%arg0: i32) -> (i32, i32) {
    %c0_i32 = arith.constant 0 : i32
    %c0_i32_0 = arith.constant 0 : i32
    %c0_i32_1 = arith.constant 0 : i32
    return %c0_i32, %c0_i32_0 : i32, i32
  }
  func.func @transform_3(%arg0: i32) -> (i32, i32) {
    %c0_i32 = arith.constant 0 : i32
    %c0_i32_0 = arith.constant 0 : i32
    %c0_i32_1 = arith.constant 0 : i32
    return %c0_i32, %c0_i32_0 : i32, i32
  }
  func.func @transform_4(%arg0: i32) -> (i32, i32) {
    %c0_i32 = arith.constant 0 : i32
    %c0_i32_0 = arith.constant 0 : i32
    %c0_i32_1 = arith.constant 0 : i32
    return %c0_i32, %c0_i32_0 : i32, i32
  }
  func.func @transform_5(%arg0: i32) -> (i32, i32) {
    %c0_i32 = arith.constant 0 : i32
    %c0_i32_0 = arith.constant 0 : i32
    %c0_i32_1 = arith.constant 0 : i32
    return %c0_i32, %c0_i32_0 : i32, i32
  }
  func.func @transform_6(%arg0: i32) -> (i32, i32) {
    %c0_i32 = arith.constant 0 : i32
    %c0_i32_0 = arith.constant 0 : i32
    %c0_i32_1 = arith.constant 0 : i32
    return %c0_i32, %c0_i32_0 : i32, i32
  }
  func.func @transform_7(%arg0: i32) -> (i32, i32) {
    %c0_i32 = arith.constant 0 : i32
    %c0_i32_0 = arith.constant 0 : i32
    return %c0_i32, %arg0 : i32, i32
  }
}

</mosaic_0001>

<llo_original>
// kernel: tpu_custom_call.1
$region0: #{tpu_custom_call.1}
  #allocation0 [shape = 'u32[]', space=smem, size = 0x4, offset = 0x4, fixed_abs, tag = 'smem constant byte address 0x4 - core index']
  #allocation1 [shape = 'u32[72,128]{1,0:T(1,128)}', space=vmem, size = 0x9000, scoped, tag = 'internal scratch']
  #allocation2 [shape = 'f32[1,1]{1,0:T(1,128)S(1)}', space=vmem, size = 0x200, scoped, tag = 'scoped memory for tpu_custom_call.1']
  %s0 = inlined_call_operand.vmem [shape: f32[128,16], index: 0, kind: input, shape index: {}]
  %s1 = inlined_call_operand.vmem [shape: bf16[64,16], index: 1, kind: input, shape index: {}]
  %s2 = inlined_call_operand.vmem [shape: f32[64,1], index: 2, kind: input, shape index: {}]
  %s3 = inlined_call_operand.vmem [shape: bf16[32,64], index: 3, kind: input, shape index: {}]
  %s4 = inlined_call_operand.vmem [shape: f32[32,1], index: 4, kind: input, shape index: {}]
  %s5 = inlined_call_operand.vmem [shape: f32[32,1], index: 5, kind: input, shape index: {}]
  %s6 = inlined_call_operand.<no memory space> [shape: f32[1,1], index: 6, kind: input, shape index: {}]
  %s7 = inlined_call_operand.hbm [shape: f32[1,128], index: 7, kind: output, shape index: {}]
  %s8 = sld [smem:[#allocation0]]
  $region38: #{tpu_custom_call.1} parent=0
    _
  %s10 = ssub.s32 1, %s8
  %s11 = scalar_select 0, %s10, %s8
  %v12 = vstv %s6
  %13 = vst [vmem:[#allocation2] sm:$0x1] %v12
  $region1: #{tpu_custom_call.1} parent=0
    #allocation3 [shape = 'u8[512]{0}', space=vmem, size = 0x400, scoped, tag = 'output window, operand 0, single buffered']
    #allocation4 [shape = 's32[1]{0}', space=sflag, size = 0x4, scoped, tag = 'scoped memory for tpu_custom_call.1']
    %14 = vsyncpa [#allocation4], 0
    // Predicated region
    $region2: #{tpu_custom_call.1} parent=1 // pred_check
      _
    $region3: #{tpu_custom_call.1} parent=1 // pred_check_branch
      %16 = sbr.rel (0) target = $region5
    $region4: #{tpu_custom_call.1} parent=1 // pred_region
      _
    $region5: #{tpu_custom_call.1} parent=1 // pred_fallthru
      _
    // Predicated region
    $region6: #{tpu_custom_call.1} parent=1 // pred_check
      _
    $region7: #{tpu_custom_call.1} parent=1 // pred_check_branch
      %18 = sbr.rel (0) target = $region9
    $region8: #{tpu_custom_call.1} parent=1 // pred_region
      _
    $region9: #{tpu_custom_call.1} parent=1 // pred_fallthru
      _
    // Predicated region
    $region10: #{tpu_custom_call.1} parent=1 // pred_check
      _
    $region11: #{tpu_custom_call.1} parent=1 // pred_check_branch
      %20 = sbr.rel (0) target = $region13
    $region12: #{tpu_custom_call.1} parent=1 // pred_region
      _
    $region13: #{tpu_custom_call.1} parent=1 // pred_fallthru
      _
    // Predicated region
    $region14: #{tpu_custom_call.1} parent=1 // pred_check
      _
    $region15: #{tpu_custom_call.1} parent=1 // pred_check_branch
      %22 = sbr.rel (0) target = $region17
    $region16: #{tpu_custom_call.1} parent=1 // pred_region
      _
    $region17: #{tpu_custom_call.1} parent=1 // pred_fallthru
      _
    // Predicated region
    $region18: #{tpu_custom_call.1} parent=1 // pred_check
      _
    $region19: #{tpu_custom_call.1} parent=1 // pred_check_branch
      %24 = sbr.rel (0) target = $region21
    $region20: #{tpu_custom_call.1} parent=1 // pred_region
      _
    $region21: #{tpu_custom_call.1} parent=1 // pred_fallthru
      _
    // Predicated region
    $region22: #{tpu_custom_call.1} parent=1 // pred_check
      _
    $region23: #{tpu_custom_call.1} parent=1 // pred_check_branch
      %26 = sbr.rel (0) target = $region25
    $region24: #{tpu_custom_call.1} parent=1 // pred_region
      _
    $region25: #{tpu_custom_call.1} parent=1 // pred_fallthru
      _
    // Predicated region
    $region26: #{tpu_custom_call.1} parent=1 // pred_check
      _
    $region27: #{tpu_custom_call.1} parent=1 // pred_check_branch
      %28 = sbr.rel (0) target = $region29
    $region28: #{tpu_custom_call.1} parent=1 // pred_region
      _
    $region29: #{tpu_custom_call.1} parent=1 // pred_fallthru
      _
    %v30 = vld [vmem:[%s1] sm:$0xf]
    %v31 = vld [vmem:[%s1 + $0x4] sm:$0xf]
    %v32 = vld [vmem:[%s1 + $0x8] sm:$0xf]
    %v33 = vld [vmem:[%s1 + $0xc] sm:$0xf]
    %v34 = vld [vmem:[%s1 + $0x10] sm:$0xf]
    %v35 = vld [vmem:[%s1 + $0x14] sm:$0xf]
    %v36 = vld [vmem:[%s1 + $0x18] sm:$0xf]
    %v37 = vld [vmem:[%s1 + $0x1c] sm:$0xf]
    %v38 = vld [vmem:[%s2] sm:$0xff]
    %v39 = vld [vmem:[%s2 + $0x8] sm:$0xff]
    %v40 = vld [vmem:[%s2 + $0x10] sm:$0xff]
    %v41 = vld [vmem:[%s2 + $0x18] sm:$0xff]
    %v42 = vld [vmem:[%s2 + $0x20] sm:$0xff]
    %v43 = vld [vmem:[%s2 + $0x28] sm:$0xff]
    %v44 = vld [vmem:[%s2 + $0x30] sm:$0xff]
    %v45 = vld [vmem:[%s2 + $0x38] sm:$0xff]
    %v46 = vld [vmem:[%s3] sm:$0xf]
    %v47 = vld [vmem:[%s3 + $0x4] sm:$0xf]
    %v48 = vld [vmem:[%s3 + $0x8] sm:$0xf]
    %v49 = vld [vmem:[%s3 + $0xc] sm:$0xf]
    %v50 = vld [vmem:[%s4] sm:$0xff]
    %v51 = vld [vmem:[%s4 + $0x8] sm:$0xff]
    %v52 = vld [vmem:[%s4 + $0x10] sm:$0xff]
    %v53 = vld [vmem:[%s4 + $0x18] sm:$0xff]
    %v54 = vld [vmem:[%s5] sm:$0xff]
    %v55 = vld [vmem:[%s5 + $0x8] sm:$0xff]
    %v56 = vld [vmem:[%s5 + $0x10] sm:$0xff]
    %v57 = vld [vmem:[%s5 + $0x18] sm:$0xff]
    %v58 = vld [vmem:[#allocation2] sm:$0x1]
    %v59 = vld [vmem:[%s0] sm:$0xff]
    %v60 = vld [vmem:[%s0 + $0x8] sm:$0xff]
    %v61 = vld [vmem:[%s0 + $0x10] sm:$0xff]
    %v62 = vld [vmem:[%s0 + $0x18] sm:$0xff]
    %v63 = vld [vmem:[%s0 + $0x20] sm:$0xff]
    %v64 = vld [vmem:[%s0 + $0x28] sm:$0xff]
    %v65 = vld [vmem:[%s0 + $0x30] sm:$0xff]
    %v66 = vld [vmem:[%s0 + $0x38] sm:$0xff]
    %v67 = vld [vmem:[%s0 + $0x40] sm:$0xff]
    %v68 = vld [vmem:[%s0 + $0x48] sm:$0xff]
    %v69 = vld [vmem:[%s0 + $0x50] sm:$0xff]
    %v70 = vld [vmem:[%s0 + $0x58] sm:$0xff]
    %v71 = vld [vmem:[%s0 + $0x60] sm:$0xff]
    %v72 = vld [vmem:[%s0 + $0x68] sm:$0xff]
    %v73 = vld [vmem:[%s0 + $0x70] sm:$0xff]
    %v74 = vld [vmem:[%s0 + $0x78] sm:$0xff]
    %v75 = vpack.c.bf16 %v60, %v59
    %v76 = vpack.c.bf16 %v62, %v61
    %v77 = vpack.c.bf16 %v64, %v63
    %v78 = vpack.c.bf16 %v66, %v65
    %v79 = vpack.c.bf16 %v68, %v67
    %v80 = vpack.c.bf16 %v70, %v69
    %v81 = vpack.c.bf16 %v72, %v71
    %v82 = vpack.c.bf16 %v74, %v73
    %84 = vset.pattern.permute.xlu0 0
    %85 = vperm.xlu0 %84, %v38
    %v86 = vpop.permute.xlu0 %85
    %89 = vset.pattern.permute.xlu0 0
    %90 = vperm.xlu0 %89, %v39
    %v91 = vpop.permute.xlu0 %90
    %94 = vset.pattern.permute.xlu0 0
    %95 = vperm.xlu0 %94, %v40
    %v96 = vpop.permute.xlu0 %95
    %99 = vset.pattern.permute.xlu0 0
    %100 = vperm.xlu0 %99, %v41
    %v101 = vpop.permute.xlu0 %100
    %104 = vset.pattern.permute.xlu0 0
    %105 = vperm.xlu0 %104, %v42
    %v106 = vpop.permute.xlu0 %105
    %109 = vset.pattern.permute.xlu0 0
    %110 = vperm.xlu0 %109, %v43
    %v111 = vpop.permute.xlu0 %110
    %114 = vset.pattern.permute.xlu0 0
    %115 = vperm.xlu0 %114, %v44
    %v116 = vpop.permute.xlu0 %115
    %119 = vset.pattern.permute.xlu0 0
    %120 = vperm.xlu0 %119, %v45
    %v121 = vpop.permute.xlu0 %120
    %v131 = vunpack.c.l.b16 %v30
    %v132 = vunpack.c.l.b16 %v31
    %v133 = vunpack.c.l.b16 %v32
    %v134 = vunpack.c.l.b16 %v33
    %v135 = vunpack.c.l.b16 %v34
    %v136 = vunpack.c.l.b16 %v35
    %v137 = vunpack.c.l.b16 %v36
    %v138 = vunpack.c.l.b16 %v37
    %v139 = vpack.c.b16 %v132, %v131
    %v140 = vpack.c.b16 %v134, %v133
    %v141 = vpack.c.b16 %v136, %v135
    %v142 = vpack.c.b16 %v138, %v137
    %vm143 = vcmask 130048
    %v145 = vsel %vm143, %v139, 0
    %v148 = vsel %vm143, %v140, 0
    %v151 = vsel %vm143, %v141, 0
    %v154 = vsel %vm143, %v142, 0
    %v157 = vsel %vm143, %v75, 0
    %v160 = vsel %vm143, %v76, 0
    %v163 = vsel %vm143, %v77, 0
    %v166 = vsel %vm143, %v78, 0
    %v169 = vsel %vm143, %v79, 0
    %v172 = vsel %vm143, %v80, 0
    %v175 = vsel %vm143, %v81, 0
    %v178 = vsel %vm143, %v82, 0
    %180 = vmatpush.bf16.xpose.msra.mxu0 %v178
    %181 = vmatpush.bf16.xpose.msra.mxu0 %v175
    %182 = vmatpush.bf16.xpose.msra.mxu0 %v172
    %183 = vmatpush.bf16.xpose.msra.mxu0 %v169
    %184 = vmatpush.bf16.xpose.msra.mxu0 %v166
    %185 = vmatpush.bf16.xpose.msra.mxu0 %v163
    %186 = vmatpush.bf16.xpose.msra.mxu0 %v160
    %187 = vmatpush.bf16.xpose.msra.mxu0 %v157
    %188 = vmatmul.bf16.gmra.mxu0 %v145
    %v189 = vpop.f32.mrf.mxu0
    %v190 = vadd.f32 %v86, %v189
    %v191 = vpop.f32.mrf.mxu0
    %v192 = vadd.f32 %v91, %v191
    %193 = vmatmul.bf16.gmra.mxu0 %v148
    %v194 = vpop.f32.mrf.mxu0
    %v195 = vadd.f32 %v96, %v194
    %v196 = vpop.f32.mrf.mxu0
    %v197 = vadd.f32 %v101, %v196
    %198 = vmatmul.bf16.gmra.mxu0 %v151
    %v199 = vpop.f32.mrf.mxu0
    %v200 = vadd.f32 %v106, %v199
    %v201 = vpop.f32.mrf.mxu0
    %v202 = vadd.f32 %v111, %v201
    %203 = vmatmul.bf16.gmra.mxu0 %v154
    %v204 = vpop.f32.mrf.mxu0
    %v205 = vadd.f32 %v116, %v204
    %v206 = vpop.f32.mrf.mxu0
    %v207 = vadd.f32 %v121, %v206
    %208 = vdwg.mxu0
    %v209 = vmax.f32 %v190, 0.0
    %v210 = vmax.f32 %v192, 0.0
    %v211 = vmax.f32 %v195, 0.0
    %v212 = vmax.f32 %v197, 0.0
    %v213 = vmax.f32 %v200, 0.0
    %v214 = vmax.f32 %v202, 0.0
    %v215 = vmax.f32 %v205, 0.0
    %v216 = vmax.f32 %v207, 0.0
    %v217 = vpack.c.bf16 %v210, %v209
    %v218 = vpack.c.bf16 %v212, %v211
    %v219 = vpack.c.bf16 %v214, %v213
    %v220 = vpack.c.bf16 %v216, %v215
    %222 = vset.pattern.permute.xlu0 0
    %223 = vperm.xlu0 %222, %v50
    %v224 = vpop.permute.xlu0 %223
    %227 = vset.pattern.permute.xlu0 0
    %228 = vperm.xlu0 %227, %v51
    %v229 = vpop.permute.xlu0 %228
    %232 = vset.pattern.permute.xlu0 0
    %233 = vperm.xlu0 %232, %v52
    %v234 = vpop.permute.xlu0 %233
    %237 = vset.pattern.permute.xlu0 0
    %238 = vperm.xlu0 %237, %v53
    %v239 = vpop.permute.xlu0 %238
    %v245 = vunpack.c.l.b16 %v46
    %v246 = vunpack.c.l.b16 %v47
    %v247 = vunpack.c.l.b16 %v48
    %v248 = vunpack.c.l.b16 %v49
    %v249 = vpack.c.b16 %v246, %v245
    %v250 = vpack.c.b16 %v248, %v247
    %vm251 = vcmask 523264
    %v253 = vsel %vm251, %v249, 0
    %v256 = vsel %vm251, %v250, 0
    %258 = vmatpush.bf16.msra.mxu0 0
    %259 = vmatpush.bf16.msra.mxu0 0
    %260 = vmatpush.bf16.msra.mxu0 0
    %261 = vmatpush.bf16.msra.mxu0 0
    %262 = vmatpush.bf16.msra.mxu0 %v220
    %263 = vmatpush.bf16.msra.mxu0 %v219
    %264 = vmatpush.bf16.msra.mxu0 %v218
    %265 = vmatpush.bf16.msra.mxu0 %v217
    %266 = vmatmul.bf16.gmra.mxu0 %v253
    %v267 = vpop.f32.mrf.mxu0
    %v268 = vadd.f32 %v224, %v267
    %v269 = vpop.f32.mrf.mxu0
    %v270 = vadd.f32 %v229, %v269
    %271 = vmatmul.bf16.gmra.mxu0 %v256
    %v272 = vpop.f32.mrf.mxu0
    %v273 = vadd.f32 %v234, %v272
    %v274 = vpop.f32.mrf.mxu0
    %v275 = vadd.f32 %v239, %v274
    %276 = vdwg.mxu0
    %v277 = vmax.f32 %v268, 0.0
    %v278 = vmax.f32 %v270, 0.0
    %v279 = vmax.f32 %v273, 0.0
    %v280 = vmax.f32 %v275, 0.0
    %282 = vset.pattern.permute.xlu0 0
    %283 = vperm.xlu0 %282, %v54
    %v284 = vpop.permute.xlu0 %283
    %287 = vset.pattern.permute.xlu0 0
    %288 = vperm.xlu0 %287, %v55
    %v289 = vpop.permute.xlu0 %288
    %292 = vset.pattern.permute.xlu0 0
    %293 = vperm.xlu0 %292, %v56
    %v294 = vpop.permute.xlu0 %293
    %297 = vset.pattern.permute.xlu0 0
    %298 = vperm.xlu0 %297, %v57
    %v299 = vpop.permute.xlu0 %298
    %v301 = vmul.f32 %v277, %v284
    %v302 = vmul.f32 %v278, %v289
    %v303 = vmul.f32 %v279, %v294
    %v304 = vmul.f32 %v280, %v299
    %v305 = vadd.f32 %v301, %v302
    %v306 = vadd.f32 %v305, %v303
    %v307 = vadd.f32 %v306, %v304
    %v308 = vrot.slane %v307, 4
    %v309 = vadd.f32 %v307, %v308
    %v310 = vrot.slane %v309, 2
    %v311 = vadd.f32 %v309, %v310
    %v312 = vrot.slane %v311, 1
    %v313 = vadd.f32 %v311, %v312
    %315 = vset.pattern.permute.xlu0 0
    %316 = vperm.xlu0 %315, %v58
    %v317 = vpop.permute.xlu0 %316
    %v319 = vperm.slane %v317, 0
    %v320 = vadd.f32 %v313, %v319
    %321 = vst [vmem:[#allocation3] sm:$0x1] %v320
    // Predicated region
    $region30: #{tpu_custom_call.1} parent=1 // pred_check
      _
    $region31: #{tpu_custom_call.1} parent=1 // pred_check_branch
      %323 = sbr.rel (0) target = $region33
    $region32: #{tpu_custom_call.1} parent=1 // pred_region
      %325 = vsyncadd [#allocation4], 0
      %s327 = sshll.u32 [#allocation3], 4
      %s328 = int_to_ptr.vmem [resolvable:$true] %s327
      %s329 = sshll.u32 %s7, 4
      %s330 = int_to_ptr.hbm [resolvable:$true] %s329
      %332 = dma.vmem_to_hbm [thread:$0]  %s328, 16, %s330, [#allocation4]
    $region33: #{tpu_custom_call.1} parent=1 // pred_fallthru
      _
    // Predicated region
    $region34: #{tpu_custom_call.1} parent=1 // pred_check
      _
    $region35: #{tpu_custom_call.1} parent=1 // pred_check_branch
      %334 = sbr.rel (0) target = $region37
    $region36: #{tpu_custom_call.1} parent=1 // pred_region
      %336 = dma.done [#allocation4], 16
    $region37: #{tpu_custom_call.1} parent=1 // pred_fallthru
      _
    %337 = vsyncpa [#allocation4], 1

</llo_original>
